<compile_context>
chip_gen: v7x
topology: tpu7x:2x2x1
jax: 0.10.0
libtpu: 0.0.40
codegen_flags: <defaults>
</compile_context>

<pallas_src>
import math

import jax
import jax.numpy as jnp
from jax.experimental import pallas as pl
from jax.experimental.pallas import tpu as pltpu


def _attention_kernel(h_ref, encf_ref, wh_ref, we_ref, b_ref, v_ref, out_ref):
    """One grid step == one block of BB batch rows.

    h_ref   : (BB, H)       bf16  decoder-hidden rows for this block
    encf_ref: (BB*S, 2H)    bf16  flattened encoder rows for this block
    wh_ref  : (H, H)        bf16  W.T rows multiplying the hidden part
    we_ref  : (2H, H)       bf16  W.T rows multiplying the encoder part
    b_ref   : (1, H)        f32   Linear bias
    v_ref   : (H, 1)        f32   scoring vector (as a column for MXU matvec)
    out_ref : (BB, 2H)      f32   context vectors
    """
    BB = h_ref.shape[0]
    R = encf_ref.shape[0]          # = BB * S flattened (batch, seq) rows
    S = R // BB

    # 0/1 selection matrices encoding the batch <-> flat-row grouping.
    #   sel[b, r] = 1 iff flat row r belongs to batch b    (BB, R)
    #   rep[r, b] = 1 iff flat row r belongs to batch b    (R, BB)
    r_of_col = jax.lax.broadcasted_iota(jnp.int32, (BB, R), 1)
    b_of_row = jax.lax.broadcasted_iota(jnp.int32, (BB, R), 0)
    sel = jnp.logical_and(r_of_col >= b_of_row * S,
                          r_of_col < (b_of_row + 1) * S).astype(jnp.float32)
    r_of_row = jax.lax.broadcasted_iota(jnp.int32, (R, BB), 0)
    b_of_col = jax.lax.broadcasted_iota(jnp.int32, (R, BB), 1)
    rep = jnp.logical_and(r_of_row >= b_of_col * S,
                          r_of_row < (b_of_col + 1) * S).astype(jnp.float32)

    enc = encf_ref[...]                                               # (R, 2H) bf16

    # energy = tanh(Linear(cat([h_rep, enc], -1))) with the concat folded into
    # two matmuls: cat @ W.T == h @ W_h + enc @ W_e.
    h_proj = jnp.dot(h_ref[...], wh_ref[...],
                     preferred_element_type=jnp.float32) + b_ref[...]  # (BB, H)
    e_proj = jnp.dot(enc, we_ref[...],
                     preferred_element_type=jnp.float32)               # (R, H)
    h_rep = jnp.dot(rep, h_proj, preferred_element_type=jnp.float32)   # (R, H)
    energy = jnp.tanh(e_proj + h_rep)                                  # (R, H)

    # attention scores: energy @ v  (one MXU matvec for the whole block)
    scores = jnp.dot(energy, v_ref[...],
                     preferred_element_type=jnp.float32)               # (R, 1)

    # Per-batch softmax over each segment of S rows, in the flat layout.
    # A single global max is a valid per-batch-constant shift; the per-batch
    # sums are MXU segment-sums against `sel`.
    m = jnp.max(scores, axis=0, keepdims=True)                         # (1, 1)
    e = jnp.exp(scores - m)                                            # (R, 1)
    seg_sum = jnp.dot(sel, e, preferred_element_type=jnp.float32)      # (BB, 1)
    inv_rep = jnp.dot(rep, pl.reciprocal(seg_sum, approx=True),
                      preferred_element_type=jnp.float32)              # (R, 1)
    w_flat = e * inv_rep                                               # (R, 1)

    # context = attn_weights @ encoder_outputs, again as an MXU segment-sum.
    weighted = enc.astype(jnp.float32) * w_flat                        # (R, 2H)
    out_ref[...] = jnp.dot(sel, weighted,
                           preferred_element_type=jnp.float32)         # (BB, 2H)


def _pick_block_batch(B):
    """Batch rows per grid step, chosen so block shapes stay (8,128)-legal."""
    if B <= 16:
        return B                     # block == full array dims -> always legal
    for cand in (16, 8):             # multiples of 8 -> legal sublane tiling
        if B % cand == 0:
            return cand
    return B                         # fallback: whole batch in one step


@jax.jit
def attention_forward(hidden, encoder_outputs, weight, bias, v):
    """Pallas equivalent of Attention.forward.

    hidden:          (L, B, H)
    encoder_outputs: (B, S, 2H)
    weight:          (H, 3H)   nn.Linear weight
    bias:            (H,)      nn.Linear bias
    v:               (H,)      scoring vector
    returns:         (B, 2H)
    """
    L, B, H = hidden.shape
    Bq, S, E2 = encoder_outputs.shape
    assert E2 == 2 * H and L == Bq, "forward requires num_layers == batch and enc dim == 2H"

    BB = _pick_block_batch(B)
    num_blocks = B // BB

    # hidden.permute(1,0,2)[-1] -> (L, H); rows get paired with batch index.
    h_last = jnp.transpose(hidden, (1, 0, 2))[-1].astype(jnp.bfloat16)      # (B, H)

    # Flatten (batch, seq) rows so the W_e projection is one big MXU matmul.
    enc_flat = encoder_outputs.reshape(B * S, 2 * H).astype(jnp.bfloat16)   # (B*S, 2H)

    # Split W.T for the folded-concat matmul.
    wT = weight.T                                                           # (3H, H)
    w_h = wT[:H].astype(jnp.bfloat16)                                       # (H, H)
    w_e = wT[H:].astype(jnp.bfloat16)                                       # (2H, H)
    b2d = bias.reshape(1, H).astype(jnp.float32)
    v_col = v.reshape(H, 1).astype(jnp.float32)

    grid_spec = pltpu.PrefetchScalarGridSpec(
        num_scalar_prefetch=0,
        grid=(num_blocks,),
        in_specs=[
            pl.BlockSpec((BB, H), lambda i: (i, 0)),            # h_last block
            pl.BlockSpec((BB * S, 2 * H), lambda i: (i, 0)),    # encoder rows
            pl.BlockSpec((H, H), lambda i: (0, 0)),             # w_h (resident)
            pl.BlockSpec((2 * H, H), lambda i: (0, 0)),         # w_e (resident)
            pl.BlockSpec((1, H), lambda i: (0, 0)),             # bias
            pl.BlockSpec((H, 1), lambda i: (0, 0)),             # v column
        ],
        out_specs=pl.BlockSpec((BB, 2 * H), lambda i: (i, 0)),
    )

    return pl.pallas_call(
        _attention_kernel,
        out_shape=jax.ShapeDtypeStruct((B, 2 * H), jnp.float32),
        grid_spec=grid_spec,
        compiler_params=pltpu.CompilerParams(dimension_semantics=("parallel",)),
    )(h_last, enc_flat, w_h, w_e, b2d, v_col)


def attention_reference(hidden, encoder_outputs, weight, bias, v):
    """Pure-JAX f32 transliteration of the PyTorch forward (for verification)."""
    B, S, _ = encoder_outputs.shape
    h = jnp.transpose(hidden, (1, 0, 2))[-1]                 # (L, H)
    h = jnp.repeat(h[:, None, :], S, axis=1)                 # (L, S, H)
    cat = jnp.concatenate([h, encoder_outputs], axis=2)      # (B, S, 3H)
    energy = jnp.tanh(cat @ weight.T + bias)                 # (B, S, H)
    energy = jnp.transpose(energy, (0, 2, 1))                # (B, H, S)
    vb = jnp.broadcast_to(v[None, None, :], (B, 1, v.shape[0]))
    attn_energies = jnp.squeeze(vb @ energy, axis=1)         # (B, S)
    attn_weights = jax.nn.softmax(attn_energies, axis=1)
    context = jnp.squeeze(attn_weights[:, None, :] @ encoder_outputs, axis=1)
    return context                                           # (B, 2H)


if __name__ == "__main__":
    # Small shapes: hidden_size=32, batch=2, num_layers=2 (== batch, required
    # by the original forward), seq=8, encoder feature dim = 2*hidden_size.
    H, B, L, S = 32, 2, 2, 8

    key = jax.random.PRNGKey(0)
    k_hid, k_enc, k_w, k_b, k_v = jax.random.split(key, 5)

    hidden = jax.random.normal(k_hid, (L, B, H), dtype=jnp.float32)
    encoder_outputs = jax.random.normal(k_enc, (B, S, 2 * H), dtype=jnp.float32)

    # Deterministic parameter init mirroring the PyTorch module:
    #   nn.Linear(3H, H): weight/bias ~ U(-1/sqrt(3H), 1/sqrt(3H))
    #   v ~ U(-1/sqrt(H), 1/sqrt(H))
    lin_std = 1.0 / math.sqrt(3 * H)
    v_std = 1.0 / math.sqrt(H)
    weight = jax.random.uniform(k_w, (H, 3 * H), jnp.float32, -lin_std, lin_std)
    bias = jax.random.uniform(k_b, (H,), jnp.float32, -lin_std, lin_std)
    v = jax.random.uniform(k_v, (H,), jnp.float32, -v_std, v_std)

    out = attention_forward(hidden, encoder_outputs, weight, bias, v)
    out = jax.block_until_ready(out)

    ref = attention_reference(hidden, encoder_outputs, weight, bias, v)
    assert out.shape == (B, 2 * H), out.shape
    # bf16 matmul inputs + approx reciprocal => loosened tolerance vs f32 ref.
    max_err = float(jnp.max(jnp.abs(out - ref)))
    assert jnp.allclose(out, ref, atol=3e-2, rtol=3e-2), max_err

    print("KERNEL_OK")
</pallas_src>

<mosaic_0001>
module attributes {stable_mosaic.version = 11 : i64} {
  func.func @_attention_kernel(%arg0: i32, %arg1: memref<2x32xbf16, #tpu.memory_space<vmem>>, %arg2: memref<16x64xbf16, #tpu.memory_space<vmem>>, %arg3: memref<32x32xbf16, #tpu.memory_space<vmem>>, %arg4: memref<64x32xbf16, #tpu.memory_space<vmem>>, %arg5: memref<1x32xf32, #tpu.memory_space<vmem>>, %arg6: memref<32x1xf32, #tpu.memory_space<vmem>>, %arg7: memref<2x64xf32, #tpu.memory_space<vmem>>) attributes {dimension_semantics = [#tpu.dimension_semantics<parallel>], iteration_bounds = array<i64: 1>, scalar_prefetch = 0 : i64, scratch_operands = 0 : i64, tpu.core_type = #tpu.core_type<tc>, window_params = [{transform_indices = @transform_0, window_bounds = array<i64: 2, 32>}, {transform_indices = @transform_1, window_bounds = array<i64: 16, 64>}, {pipeline_mode = #tpu.pipeline_mode<synchronous>, transform_indices = @transform_2, window_bounds = array<i64: 32, 32>}, {pipeline_mode = #tpu.pipeline_mode<synchronous>, transform_indices = @transform_3, window_bounds = array<i64: 64, 32>}, {pipeline_mode = #tpu.pipeline_mode<synchronous>, transform_indices = @transform_4, window_bounds = array<i64: 1, 32>}, {pipeline_mode = #tpu.pipeline_mode<synchronous>, transform_indices = @transform_5, window_bounds = array<i64: 32, 1>}, {transform_indices = @transform_6, window_bounds = array<i64: 2, 64>}]} {
    %0 = tpu.iota {dimensions = array<i32: 1>} : vector<2x16xi32>
    %1 = tpu.iota {dimensions = array<i32: 0>} : vector<2x16xi32>
    %c8_i32 = arith.constant 8 : i32
    %2 = vector.broadcast %c8_i32 : i32 to vector<2x16xi32>
    %3 = arith.muli %1, %2 : vector<2x16xi32>
    %4 = arith.cmpi sge, %0, %3 : vector<2x16xi32>
    %c1_i32 = arith.constant 1 : i32
    %5 = vector.broadcast %c1_i32 : i32 to vector<2x16xi32>
    %6 = arith.addi %1, %5 : vector<2x16xi32>
    %c8_i32_0 = arith.constant 8 : i32
    %7 = vector.broadcast %c8_i32_0 : i32 to vector<2x16xi32>
    %8 = arith.muli %6, %7 : vector<2x16xi32>
    %9 = arith.cmpi slt, %0, %8 : vector<2x16xi32>
    %10 = arith.andi %4, %9 : vector<2x16xi1>
    %11 = arith.extui %10 : vector<2x16xi1> to vector<2x16xi32>
    %12 = arith.sitofp %11 : vector<2x16xi32> to vector<2x16xf32>
    %13 = tpu.iota {dimensions = array<i32: 0>} : vector<16x2xi32>
    %14 = tpu.iota {dimensions = array<i32: 1>} : vector<16x2xi32>
    %c8_i32_1 = arith.constant 8 : i32
    %15 = vector.broadcast %c8_i32_1 : i32 to vector<16x2xi32>
    %16 = arith.muli %14, %15 : vector<16x2xi32>
    %17 = arith.cmpi sge, %13, %16 : vector<16x2xi32>
    %c1_i32_2 = arith.constant 1 : i32
    %18 = vector.broadcast %c1_i32_2 : i32 to vector<16x2xi32>
    %19 = arith.addi %14, %18 : vector<16x2xi32>
    %c8_i32_3 = arith.constant 8 : i32
    %20 = vector.broadcast %c8_i32_3 : i32 to vector<16x2xi32>
    %21 = arith.muli %19, %20 : vector<16x2xi32>
    %22 = arith.cmpi slt, %13, %21 : vector<16x2xi32>
    %23 = arith.andi %17, %22 : vector<16x2xi1>
    %24 = arith.extui %23 : vector<16x2xi1> to vector<16x2xi32>
    %25 = arith.sitofp %24 : vector<16x2xi32> to vector<16x2xf32>
    %c0 = arith.constant 0 : index
    %c0_4 = arith.constant 0 : index
    %26 = vector.load %arg2[%c0, %c0_4] : memref<16x64xbf16, #tpu.memory_space<vmem>>, vector<16x64xbf16>
    %c0_5 = arith.constant 0 : index
    %c0_6 = arith.constant 0 : index
    %27 = vector.load %arg1[%c0_5, %c0_6] : memref<2x32xbf16, #tpu.memory_space<vmem>>, vector<2x32xbf16>
    %c0_7 = arith.constant 0 : index
    %c0_8 = arith.constant 0 : index
    %28 = vector.load %arg3[%c0_7, %c0_8] : memref<32x32xbf16, #tpu.memory_space<vmem>>, vector<32x32xbf16>
    %cst = arith.constant dense<0.000000e+00> : vector<2x32xf32>
    %29 = tpu.matmul %27, %28, %cst {dimension_numbers = #tpu.dot_dimension_numbers<[1], [0], [0], [1], [0, 0, 1, 1], [], []>} : vector<2x32xbf16>, vector<32x32xbf16>, vector<2x32xf32> -> vector<2x32xf32>
    %c0_9 = arith.constant 0 : index
    %c0_10 = arith.constant 0 : index
    %30 = vector.load %arg5[%c0_9, %c0_10] : memref<1x32xf32, #tpu.memory_space<vmem>>, vector<1x32xf32>
    %31 = vector.broadcast %30 : vector<1x32xf32> to vector<2x32xf32>
    %32 = arith.addf %29, %31 : vector<2x32xf32>
    %c0_11 = arith.constant 0 : index
    %c0_12 = arith.constant 0 : index
    %33 = vector.load %arg4[%c0_11, %c0_12] : memref<64x32xbf16, #tpu.memory_space<vmem>>, vector<64x32xbf16>
    %cst_13 = arith.constant dense<0.000000e+00> : vector<16x32xf32>
    %34 = tpu.matmul %26, %33, %cst_13 {dimension_numbers = #tpu.dot_dimension_numbers<[1], [0], [0], [1], [0, 0, 1, 1], [], []>} : vector<16x64xbf16>, vector<64x32xbf16>, vector<16x32xf32> -> vector<16x32xf32>
    %cst_14 = arith.constant dense<0.000000e+00> : vector<16x32xf32>
    %35 = tpu.matmul %25, %32, %cst_14 {dimension_numbers = #tpu.dot_dimension_numbers<[1], [0], [0], [1], [0, 0, 1, 1], [], []>} : vector<16x2xf32>, vector<2x32xf32>, vector<16x32xf32> -> vector<16x32xf32>
    %36 = arith.addf %34, %35 : vector<16x32xf32>
    %37 = math.tanh %36 : vector<16x32xf32>
    %c0_15 = arith.constant 0 : index
    %c0_16 = arith.constant 0 : index
    %38 = vector.load %arg6[%c0_15, %c0_16] : memref<32x1xf32, #tpu.memory_space<vmem>>, vector<32x1xf32>
    %cst_17 = arith.constant dense<0.000000e+00> : vector<16x1xf32>
    %39 = tpu.matmul %37, %38, %cst_17 {dimension_numbers = #tpu.dot_dimension_numbers<[1], [0], [0], [1], [0, 0, 1, 1], [], []>} : vector<16x32xf32>, vector<32x1xf32>, vector<16x1xf32> -> vector<16x1xf32>
    %cst_18 = arith.constant dense<0xFF800000> : vector<1xf32>
    %40 = vector.multi_reduction <maximumf>, %39, %cst_18 [0] : vector<16x1xf32> to vector<1xf32>
    %41 = vector.shape_cast %40 : vector<1xf32> to vector<1x1xf32>
    %42 = vector.broadcast %41 : vector<1x1xf32> to vector<16x1xf32>
    %43 = arith.subf %39, %42 : vector<16x1xf32>
    %44 = math.exp %43 : vector<16x1xf32>
    %cst_19 = arith.constant dense<0.000000e+00> : vector<2x1xf32>
    %45 = tpu.matmul %12, %44, %cst_19 {dimension_numbers = #tpu.dot_dimension_numbers<[1], [0], [0], [1], [0, 0, 1, 1], [], []>} : vector<2x16xf32>, vector<16x1xf32>, vector<2x1xf32> -> vector<2x1xf32>
    %46 = tpu.reciprocal %45 {approx = true} : vector<2x1xf32> -> vector<2x1xf32>
    %cst_20 = arith.constant dense<0.000000e+00> : vector<16x1xf32>
    %47 = tpu.matmul %25, %46, %cst_20 {dimension_numbers = #tpu.dot_dimension_numbers<[1], [0], [0], [1], [0, 0, 1, 1], [], []>} : vector<16x2xf32>, vector<2x1xf32>, vector<16x1xf32> -> vector<16x1xf32>
    %48 = arith.mulf %44, %47 : vector<16x1xf32>
    %49 = arith.extf %26 : vector<16x64xbf16> to vector<16x64xf32>
    %50 = vector.broadcast %48 : vector<16x1xf32> to vector<16x64xf32>
    %51 = arith.mulf %49, %50 : vector<16x64xf32>
    %cst_21 = arith.constant dense<0.000000e+00> : vector<2x64xf32>
    %52 = tpu.matmul %12, %51, %cst_21 {dimension_numbers = #tpu.dot_dimension_numbers<[1], [0], [0], [1], [0, 0, 1, 1], [], []>} : vector<2x16xf32>, vector<16x64xf32>, vector<2x64xf32> -> vector<2x64xf32>
    %c0_22 = arith.constant 0 : index
    %c0_23 = arith.constant 0 : index
    %53 = vector.load %arg7[%c0_22, %c0_23] : memref<2x64xf32, #tpu.memory_space<vmem>>, vector<2x64xf32>
    tpu.vector_store %arg7[%c0_22, %c0_23], %52 {strides = array<i32>} : memref<2x64xf32, #tpu.memory_space<vmem>>, vector<2x64xf32>,
    return
  }
  func.func @transform_0(%arg0: i32) -> (i32, i32) {
    %c0_i32 = arith.constant 0 : i32
    %c0_i32_0 = arith.constant 0 : i32
    return %arg0, %c0_i32 : i32, i32
  }
  func.func @transform_1(%arg0: i32) -> (i32, i32) {
    %c0_i32 = arith.constant 0 : i32
    %c0_i32_0 = arith.constant 0 : i32
    return %arg0, %c0_i32 : i32, i32
  }
  func.func @transform_2(%arg0: i32) -> (i32, i32) {
    %c0_i32 = arith.constant 0 : i32
    %c0_i32_0 = arith.constant 0 : i32
    %c0_i32_1 = arith.constant 0 : i32
    return %c0_i32, %c0_i32_0 : i32, i32
  }
  func.func @transform_3(%arg0: i32) -> (i32, i32) {
    %c0_i32 = arith.constant 0 : i32
    %c0_i32_0 = arith.constant 0 : i32
    %c0_i32_1 = arith.constant 0 : i32
    return %c0_i32, %c0_i32_0 : i32, i32
  }
  func.func @transform_4(%arg0: i32) -> (i32, i32) {
    %c0_i32 = arith.constant 0 : i32
    %c0_i32_0 = arith.constant 0 : i32
    %c0_i32_1 = arith.constant 0 : i32
    return %c0_i32, %c0_i32_0 : i32, i32
  }
  func.func @transform_5(%arg0: i32) -> (i32, i32) {
    %c0_i32 = arith.constant 0 : i32
    %c0_i32_0 = arith.constant 0 : i32
    %c0_i32_1 = arith.constant 0 : i32
    return %c0_i32, %c0_i32_0 : i32, i32
  }
  func.func @transform_6(%arg0: i32) -> (i32, i32) {
    %c0_i32 = arith.constant 0 : i32
    %c0_i32_0 = arith.constant 0 : i32
    return %arg0, %c0_i32 : i32, i32
  }
}

</mosaic_0001>

<llo_original>
// kernel: attention_forward.1
$region0: #{attention_forward.1}
  #allocation0 [shape = 'u32[]', space=smem, size = 0x4, offset = 0x4, fixed_abs, tag = 'smem constant byte address 0x4 - core index']
  #allocation1 [shape = 'u32[144,128]{1,0:T(1,128)}', space=vmem, size = 0x12000, scoped, tag = 'internal scratch']
  %s0 = inlined_call_operand.vmem [shape: bf16[2,32], index: 0, kind: input, shape index: {}]
  %s1 = inlined_call_operand.vmem [shape: bf16[16,64], index: 1, kind: input, shape index: {}]
  %s2 = inlined_call_operand.vmem [shape: bf16[32,32], index: 2, kind: input, shape index: {}]
  %s3 = inlined_call_operand.vmem [shape: bf16[64,32], index: 3, kind: input, shape index: {}]
  %s4 = inlined_call_operand.vmem [shape: f32[1,32], index: 4, kind: input, shape index: {}]
  %s5 = inlined_call_operand.vmem [shape: f32[32,1], index: 5, kind: input, shape index: {}]
  %s6 = inlined_call_operand.hbm [shape: f32[2,64], index: 6, kind: output, shape index: {}]
  %s7 = sld [smem:[#allocation0]]
  $region34: #{attention_forward.1} parent=0
    _
  %s9 = ssub.s32 1, %s7
  %s10 = scalar_select 0, %s9, %s7
  $region1: #{attention_forward.1} parent=0
    #allocation2 [shape = 'u8[1024]{0}', space=vmem, size = 0x400, scoped, tag = 'output window, operand 0, single buffered']
    #allocation3 [shape = 's32[1]{0}', space=sflag, size = 0x4, scoped, tag = 'scoped memory for attention_forward.1']
    %11 = vsyncpa [#allocation3], 0
    // Predicated region
    $region2: #{attention_forward.1} parent=1 // pred_check
      _
    $region3: #{attention_forward.1} parent=1 // pred_check_branch
      %13 = sbr.rel (0) target = $region5
    $region4: #{attention_forward.1} parent=1 // pred_region
      _
    $region5: #{attention_forward.1} parent=1 // pred_fallthru
      _
    // Predicated region
    $region6: #{attention_forward.1} parent=1 // pred_check
      _
    $region7: #{attention_forward.1} parent=1 // pred_check_branch
      %15 = sbr.rel (0) target = $region9
    $region8: #{attention_forward.1} parent=1 // pred_region
      _
    $region9: #{attention_forward.1} parent=1 // pred_fallthru
      _
    // Predicated region
    $region10: #{attention_forward.1} parent=1 // pred_check
      _
    $region11: #{attention_forward.1} parent=1 // pred_check_branch
      %17 = sbr.rel (0) target = $region13
    $region12: #{attention_forward.1} parent=1 // pred_region
      _
    $region13: #{attention_forward.1} parent=1 // pred_fallthru
      _
    // Predicated region
    $region14: #{attention_forward.1} parent=1 // pred_check
      _
    $region15: #{attention_forward.1} parent=1 // pred_check_branch
      %19 = sbr.rel (0) target = $region17
    $region16: #{attention_forward.1} parent=1 // pred_region
      _
    $region17: #{attention_forward.1} parent=1 // pred_fallthru
      _
    // Predicated region
    $region18: #{attention_forward.1} parent=1 // pred_check
      _
    $region19: #{attention_forward.1} parent=1 // pred_check_branch
      %21 = sbr.rel (0) target = $region21
    $region20: #{attention_forward.1} parent=1 // pred_region
      _
    $region21: #{attention_forward.1} parent=1 // pred_fallthru
      _
    // Predicated region
    $region22: #{attention_forward.1} parent=1 // pred_check
      _
    $region23: #{attention_forward.1} parent=1 // pred_check_branch
      %23 = sbr.rel (0) target = $region25
    $region24: #{attention_forward.1} parent=1 // pred_region
      _
    $region25: #{attention_forward.1} parent=1 // pred_fallthru
      _
    %v25 = vlaneseq
    %v26 = vand.u32 %v25, 127
    %v27 = vlaneseq
    %v28 = vshrl.u32 %v27, 7
    %v29 = vmul.u32 %v28, 8
    %vm30 = vcmp.ge.s32.totalorder %v26, %v29
    %v31 = vadd.s32 %v28, 1
    %v32 = vmul.u32 %v31, 8
    %vm33 = vcmp.lt.s32.totalorder %v26, %v32
    %vm34 = vmand %vm30, %vm33
    %v35 = vsel %vm34, 1, 0
    %v36 = vcvt.s32.f32 %v35
    %v37 = vadd.s32 %v28, 8
    %v38 = vmul.u32 %v26, 8
    %vm39 = vcmp.ge.s32.totalorder %v28, %v38
    %vm40 = vcmp.ge.s32.totalorder %v37, %v38
    %v41 = vadd.s32 %v26, 1
    %v42 = vmul.u32 %v41, 8
    %vm43 = vcmp.lt.s32.totalorder %v28, %v42
    %vm44 = vcmp.lt.s32.totalorder %v37, %v42
    %vm45 = vmand %vm39, %vm43
    %vm46 = vmand %vm40, %vm44
    %v47 = vsel %vm45, 1, 0
    %v48 = vsel %vm46, 1, 0
    %v49 = vcvt.s32.f32 %v47
    %v50 = vcvt.s32.f32 %v48
    %v51 = vld [vmem:[%s1] sm:$0xf]
    %v52 = vld [vmem:[%s1 + $0x4] sm:$0xf]
    %v53 = vld [vmem:[%s0] sm:$0x1]
    %v54 = vld [vmem:[%s2] sm:$0xf]
    %v55 = vld [vmem:[%s2 + $0x4] sm:$0xf]
    %v56 = vld [vmem:[%s2 + $0x8] sm:$0xf]
    %v57 = vld [vmem:[%s2 + $0xc] sm:$0xf]
    %v58 = vld [vmem:[%s4] sm:$0x1]
    %v60 = vlaneseq
    %v61 = vshrl.u32 %v60, 7
    %v62 = vsub.s32 0, %v61
    %v63 = vrot.slane %v58, %v62
    %v69 = vunpack.c.l.b16 %v54
    %v70 = vunpack.c.l.b16 %v55
    %v71 = vunpack.c.l.b16 %v56
    %v72 = vunpack.c.l.b16 %v57
    %v73 = vpack.c.b16 %v70, %v69
    %v74 = vpack.c.b16 %v72, %v71
    %vm77 = vcmask 261120
    %v79 = vsel %vm77, %v53, 0
    %81 = vmatprep.subr.bf16.mxu0 0
    %82 = vmatpush1.bf16.msra.mxu0 %v73
    %83 = vmatprep.subr.bf16.mxu0 0
    %84 = vmatpush1.bf16.msra.mxu0 %v74
    %85 = vmatprep.subr.bf16.mxu0 0
    %86 = vmatpush1.bf16.msra.mxu0 0
    %87 = vmatprep.subr.bf16.mxu0 0
    %88 = vmatpush1.bf16.msra.mxu0 0
    %89 = vmatprep.subr.bf16.mxu0 0
    %90 = vmatpush1.bf16.msra.mxu0 0
    %91 = vmatprep.subr.bf16.mxu0 0
    %92 = vmatpush1.bf16.msra.mxu0 0
    %93 = vmatprep.subr.bf16.mxu0 0
    %94 = vmatpush1.bf16.msra.mxu0 0
    %95 = vmatprep.subr.bf16.mxu0 0
    %96 = vmatpush1.bf16.msra.mxu0 0
    %97 = vmatprep.subr.bf16.mxu0 0
    %98 = vmatpush1.bf16.msra.mxu0 0
    %99 = vmatprep.subr.bf16.mxu0 0
    %100 = vmatpush1.bf16.msra.mxu0 0
    %101 = vmatprep.subr.bf16.mxu0 0
    %102 = vmatpush1.bf16.msra.mxu0 0
    %103 = vmatprep.subr.bf16.mxu0 0
    %104 = vmatpush1.bf16.msra.mxu0 0
    %105 = vmatprep.subr.bf16.mxu0 0
    %106 = vmatpush1.bf16.msra.mxu0 0
    %107 = vmatprep.subr.bf16.mxu0 0
    %108 = vmatpush1.bf16.msra.mxu0 0
    %109 = vmatprep.subr.bf16.mxu0 0
    %110 = vmatpush1.bf16.msra.mxu0 0
    %111 = vmatprep.subr.bf16.mxu0 0
    %112 = vmatpush1.bf16.msra.mxu0 0
    %113 = vmatprep.mubr.bf16.mxu0 0
    %114 = vmatmul.mubr.bf16.gmra.mrb[0].mxu0 %v79
    %v115 = vpop.f32.mrb[0].mxu0
    %v116 = vadd.f32 %v63, %v115
    %v117 = vpop.f32.mrb[0].mxu0
    %v118 = vpop.f32.mrb[0].mxu0
    %v119 = vpop.f32.mrb[0].mxu0
    %120 = vdwg.mxu0
    %v121 = vld [vmem:[%s3] sm:$0xf]
    %v122 = vld [vmem:[%s3 + $0x4] sm:$0xf]
    %v123 = vld [vmem:[%s3 + $0x8] sm:$0xf]
    %v124 = vld [vmem:[%s3 + $0xc] sm:$0xf]
    %v125 = vld [vmem:[%s3 + $0x10] sm:$0xf]
    %v126 = vld [vmem:[%s3 + $0x14] sm:$0xf]
    %v127 = vld [vmem:[%s3 + $0x18] sm:$0xf]
    %v128 = vld [vmem:[%s3 + $0x1c] sm:$0xf]
    %vm129 = vcmask 15360
    %v131 = vsel %vm129, %v49, 0
    %v134 = vsel %vm129, %v50, 0
    %vm136 = vcmask 1041408
    %v138 = vsel %vm136, %v116, 0
    %140 = vmatprep.subr.mxu0 0.0
    %141 = vmatpush1.msra.mxu0 %v138
    %142 = vmatprep.subr.mxu0 0.0
    %143 = vmatpush1.msra.mxu0 0.0
    %144 = vmatprep.subr.mxu0 0.0
    %145 = vmatpush1.msra.mxu0 0.0
    %146 = vmatprep.subr.mxu0 0.0
    %147 = vmatpush1.msra.mxu0 0.0
    %148 = vmatprep.subr.mxu0 0.0
    %149 = vmatpush1.msra.mxu0 0.0
    %150 = vmatprep.subr.mxu0 0.0
    %151 = vmatpush1.msra.mxu0 0.0
    %152 = vmatprep.subr.mxu0 0.0
    %153 = vmatpush1.msra.mxu0 0.0
    %154 = vmatprep.subr.mxu0 0.0
    %155 = vmatpush1.msra.mxu0 0.0
    %156 = vmatprep.subr.mxu0 0.0
    %157 = vmatpush1.msra.mxu0 0.0
    %158 = vmatprep.subr.mxu0 0.0
    %159 = vmatpush1.msra.mxu0 0.0
    %160 = vmatprep.subr.mxu0 0.0
    %161 = vmatpush1.msra.mxu0 0.0
    %162 = vmatprep.subr.mxu0 0.0
    %163 = vmatpush1.msra.mxu0 0.0
    %164 = vmatprep.subr.mxu0 0.0
    %165 = vmatpush1.msra.mxu0 0.0
    %166 = vmatprep.subr.mxu0 0.0
    %167 = vmatpush1.msra.mxu0 0.0
    %168 = vmatprep.subr.mxu0 0.0
    %169 = vmatpush1.msra.mxu0 0.0
    %170 = vmatprep.subr.mxu0 0.0
    %171 = vmatpush1.msra.mxu0 0.0
    %172 = vmatprep.subr.mxu0 0.0
    %173 = vmatpush1.msra.mxu0 0.0
    %174 = vmatprep.subr.mxu0 0.0
    %175 = vmatpush1.msra.mxu0 0.0
    %176 = vmatprep.subr.mxu0 0.0
    %177 = vmatpush1.msra.mxu0 0.0
    %178 = vmatprep.subr.mxu0 0.0
    %179 = vmatpush1.msra.mxu0 0.0
    %180 = vmatprep.subr.mxu0 0.0
    %181 = vmatpush1.msra.mxu0 0.0
    %182 = vmatprep.subr.mxu0 0.0
    %183 = vmatpush1.msra.mxu0 0.0
    %184 = vmatprep.subr.mxu0 0.0
    %185 = vmatpush1.msra.mxu0 0.0
    %186 = vmatprep.subr.mxu0 0.0
    %187 = vmatpush1.msra.mxu0 0.0
    %188 = vmatprep.subr.mxu0 0.0
    %189 = vmatpush1.msra.mxu0 0.0
    %190 = vmatprep.subr.mxu0 0.0
    %191 = vmatpush1.msra.mxu0 0.0
    %192 = vmatprep.subr.mxu0 0.0
    %193 = vmatpush1.msra.mxu0 0.0
    %194 = vmatprep.subr.mxu0 0.0
    %195 = vmatpush1.msra.mxu0 0.0
    %196 = vmatprep.subr.mxu0 0.0
    %197 = vmatpush1.msra.mxu0 0.0
    %198 = vmatprep.subr.mxu0 0.0
    %199 = vmatpush1.msra.mxu0 0.0
    %200 = vmatprep.subr.mxu0 0.0
    %201 = vmatpush1.msra.mxu0 0.0
    %202 = vmatprep.subr.mxu0 0.0
    %203 = vmatpush1.msra.mxu0 0.0
    %204 = vmatprep.mubr.f32.mxu0 0.0
    %205 = vmatmul.mubr.f32.gmra.mrb[0].mxu0 %v131
    %v206 = vpop.f32.mrb[0].mxu0
    %v207 = vadd.f32 0.0, %v206
    %v208 = vpop.f32.mrb[0].mxu0
    %209 = vmatprep.mubr.f32.mxu0 0.0
    %210 = vmatmul.mubr.f32.gmra.mrb[0].mxu0 %v134
    %v211 = vpop.f32.mrb[0].mxu0
    %v212 = vadd.f32 0.0, %v211
    %v213 = vpop.f32.mrb[0].mxu0
    %214 = vdwg.mxu0
    %v217 = vunpack.c.l.b16 %v51
    %v218 = vunpack.c.l.b16 %v52
    %v219 = vpack.c.b16 %v218, %v217
    %v228 = vunpack.c.l.b16 %v121
    %v229 = vunpack.c.l.b16 %v122
    %v230 = vunpack.c.l.b16 %v123
    %v231 = vunpack.c.l.b16 %v124
    %v232 = vunpack.c.l.b16 %v125
    %v233 = vunpack.c.l.b16 %v126
    %v234 = vunpack.c.l.b16 %v127
    %v235 = vunpack.c.l.b16 %v128
    %v236 = vpack.c.b16 %v229, %v228
    %v237 = vpack.c.b16 %v231, %v230
    %v238 = vpack.c.b16 %v233, %v232
    %v239 = vpack.c.b16 %v235, %v234
    %vm244 = vcmask 523264
    %v246 = vsel %vm244, %v219, 0
    %248 = vmatprep.subr.bf16.mxu0 0
    %249 = vmatpush1.bf16.msra.mxu0 %v236
    %250 = vmatprep.subr.bf16.mxu0 0
    %251 = vmatpush1.bf16.msra.mxu0 %v237
    %252 = vmatprep.subr.bf16.mxu0 0
    %253 = vmatpush1.bf16.msra.mxu0 %v238
    %254 = vmatprep.subr.bf16.mxu0 0
    %255 = vmatpush1.bf16.msra.mxu0 %v239
    %256 = vmatprep.subr.bf16.mxu0 0
    %257 = vmatpush1.bf16.msra.mxu0 0
    %258 = vmatprep.subr.bf16.mxu0 0
    %259 = vmatpush1.bf16.msra.mxu0 0
    %260 = vmatprep.subr.bf16.mxu0 0
    %261 = vmatpush1.bf16.msra.mxu0 0
    %262 = vmatprep.subr.bf16.mxu0 0
    %263 = vmatpush1.bf16.msra.mxu0 0
    %264 = vmatprep.subr.bf16.mxu0 0
    %265 = vmatpush1.bf16.msra.mxu0 0
    %266 = vmatprep.subr.bf16.mxu0 0
    %267 = vmatpush1.bf16.msra.mxu0 0
    %268 = vmatprep.subr.bf16.mxu0 0
    %269 = vmatpush1.bf16.msra.mxu0 0
    %270 = vmatprep.subr.bf16.mxu0 0
    %271 = vmatpush1.bf16.msra.mxu0 0
    %272 = vmatprep.subr.bf16.mxu0 0
    %273 = vmatpush1.bf16.msra.mxu0 0
    %274 = vmatprep.subr.bf16.mxu0 0
    %275 = vmatpush1.bf16.msra.mxu0 0
    %276 = vmatprep.subr.bf16.mxu0 0
    %277 = vmatpush1.bf16.msra.mxu0 0
    %278 = vmatprep.subr.bf16.mxu0 0
    %279 = vmatpush1.bf16.msra.mxu0 0
    %280 = vmatprep.mubr.bf16.mxu0 0
    %281 = vmatmul.mubr.bf16.gmra.mrb[0].mxu0 %v246
    %v282 = vpop.f32.mrb[0].mxu0
    %v283 = vadd.f32 %v207, %v282
    %v284 = vpop.f32.mrb[0].mxu0
    %v285 = vpop.f32.mrb[0].mxu0
    %v286 = vadd.f32 %v212, %v285
    %v287 = vpop.f32.mrb[0].mxu0
    %288 = vdwg.mxu0
    %v289 = vtanh.pop %v283
    %v290 = vtanh.pop %v286
    %v291 = vld [vmem:[%s5] sm:$0xff]
    %v292 = vld [vmem:[%s5 + $0x8] sm:$0xff]
    %v293 = vld [vmem:[%s5 + $0x10] sm:$0xff]
    %v294 = vld [vmem:[%s5 + $0x18] sm:$0xff]
    %v296 = vsel %vm77, %v289, 0
    %v299 = vsel %vm77, %v290, 0
    %301 = vmatprep.subr.mxu0 0.0
    %302 = vmatpush1.msra.mxu0 %v291
    %303 = vmatprep.subr.mxu0 0.0
    %304 = vmatpush1.msra.mxu0 %v292
    %305 = vmatprep.subr.mxu0 0.0
    %306 = vmatpush1.msra.mxu0 %v293
    %307 = vmatprep.subr.mxu0 0.0
    %308 = vmatpush1.msra.mxu0 %v294
    %309 = vmatprep.subr.mxu0 0.0
    %310 = vmatpush1.msra.mxu0 0.0
    %311 = vmatprep.subr.mxu0 0.0
    %312 = vmatpush1.msra.mxu0 0.0
    %313 = vmatprep.subr.mxu0 0.0
    %314 = vmatpush1.msra.mxu0 0.0
    %315 = vmatprep.subr.mxu0 0.0
    %316 = vmatpush1.msra.mxu0 0.0
    %317 = vmatprep.subr.mxu0 0.0
    %318 = vmatpush1.msra.mxu0 0.0
    %319 = vmatprep.subr.mxu0 0.0
    %320 = vmatpush1.msra.mxu0 0.0
    %321 = vmatprep.subr.mxu0 0.0
    %322 = vmatpush1.msra.mxu0 0.0
    %323 = vmatprep.subr.mxu0 0.0
    %324 = vmatpush1.msra.mxu0 0.0
    %325 = vmatprep.subr.mxu0 0.0
    %326 = vmatpush1.msra.mxu0 0.0
    %327 = vmatprep.subr.mxu0 0.0
    %328 = vmatpush1.msra.mxu0 0.0
    %329 = vmatprep.subr.mxu0 0.0
    %330 = vmatpush1.msra.mxu0 0.0
    %331 = vmatprep.subr.mxu0 0.0
    %332 = vmatpush1.msra.mxu0 0.0
    %333 = vmatprep.subr.mxu0 0.0
    %334 = vmatpush1.msra.mxu0 0.0
    %335 = vmatprep.subr.mxu0 0.0
    %336 = vmatpush1.msra.mxu0 0.0
    %337 = vmatprep.subr.mxu0 0.0
    %338 = vmatpush1.msra.mxu0 0.0
    %339 = vmatprep.subr.mxu0 0.0
    %340 = vmatpush1.msra.mxu0 0.0
    %341 = vmatprep.subr.mxu0 0.0
    %342 = vmatpush1.msra.mxu0 0.0
    %343 = vmatprep.subr.mxu0 0.0
    %344 = vmatpush1.msra.mxu0 0.0
    %345 = vmatprep.subr.mxu0 0.0
    %346 = vmatpush1.msra.mxu0 0.0
    %347 = vmatprep.subr.mxu0 0.0
    %348 = vmatpush1.msra.mxu0 0.0
    %349 = vmatprep.subr.mxu0 0.0
    %350 = vmatpush1.msra.mxu0 0.0
    %351 = vmatprep.subr.mxu0 0.0
    %352 = vmatpush1.msra.mxu0 0.0
    %353 = vmatprep.subr.mxu0 0.0
    %354 = vmatpush1.msra.mxu0 0.0
    %355 = vmatprep.subr.mxu0 0.0
    %356 = vmatpush1.msra.mxu0 0.0
    %357 = vmatprep.subr.mxu0 0.0
    %358 = vmatpush1.msra.mxu0 0.0
    %359 = vmatprep.subr.mxu0 0.0
    %360 = vmatpush1.msra.mxu0 0.0
    %361 = vmatprep.subr.mxu0 0.0
    %362 = vmatpush1.msra.mxu0 0.0
    %363 = vmatprep.subr.mxu0 0.0
    %364 = vmatpush1.msra.mxu0 0.0
    %365 = vmatprep.mubr.f32.mxu0 0.0
    %366 = vmatmul.mubr.f32.gmra.mrb[0].mxu0 %v296
    %v367 = vpop.f32.mrb[0].mxu0
    %v368 = vadd.f32 0.0, %v367
    %v369 = vpop.f32.mrb[0].mxu0
    %370 = vmatprep.mubr.f32.mxu0 0.0
    %371 = vmatmul.mubr.f32.gmra.mrb[0].mxu0 %v299
    %v372 = vpop.f32.mrb[0].mxu0
    %v373 = vadd.f32 0.0, %v372
    %v374 = vpop.f32.mrb[0].mxu0
    %375 = vdwg.mxu0
    %vm376 = vcmask 7168
    %v377 = vsel %vm376, %v368, -inf
    %v378 = vsel %vm376, %v373, -inf
    %v379 = vmax.f32 %v377, %v378
    %v380 = vrot.slane %v379, 4
    %v381 = vmax.f32 %v379, %v380
    %v382 = vrot.slane %v381, 2
    %v383 = vmax.f32 %v381, %v382
    %v384 = vrot.slane %v383, 1
    %v385 = vmax.f32 %v383, %v384
    %v386 = vsub.f32 %v368, %v385
    %v387 = vsub.f32 %v373, %v385
    %v388 = vmul.f32 %v386, 1.442695
    %v389 = vpow.pop %v388
    %v390 = vmul.f32 %v387, 1.442695
    %v391 = vpow.pop %v390
    %vm392 = vcmask 130048
    %v394 = vsel %vm392, %v36, 0
    %396 = vmatprep.subr.mxu0 0.0
    %397 = vmatpush1.msra.mxu0 %v389
    %398 = vmatprep.subr.mxu0 0.0
    %399 = vmatpush1.msra.mxu0 %v391
    %400 = vmatprep.subr.mxu0 0.0
    %401 = vmatpush1.msra.mxu0 0.0
    %402 = vmatprep.subr.mxu0 0.0
    %403 = vmatpush1.msra.mxu0 0.0
    %404 = vmatprep.subr.mxu0 0.0
    %405 = vmatpush1.msra.mxu0 0.0
    %406 = vmatprep.subr.mxu0 0.0
    %407 = vmatpush1.msra.mxu0 0.0
    %408 = vmatprep.subr.mxu0 0.0
    %409 = vmatpush1.msra.mxu0 0.0
    %410 = vmatprep.subr.mxu0 0.0
    %411 = vmatpush1.msra.mxu0 0.0
    %412 = vmatprep.subr.mxu0 0.0
    %413 = vmatpush1.msra.mxu0 0.0
    %414 = vmatprep.subr.mxu0 0.0
    %415 = vmatpush1.msra.mxu0 0.0
    %416 = vmatprep.subr.mxu0 0.0
    %417 = vmatpush1.msra.mxu0 0.0
    %418 = vmatprep.subr.mxu0 0.0
    %419 = vmatpush1.msra.mxu0 0.0
    %420 = vmatprep.subr.mxu0 0.0
    %421 = vmatpush1.msra.mxu0 0.0
    %422 = vmatprep.subr.mxu0 0.0
    %423 = vmatpush1.msra.mxu0 0.0
    %424 = vmatprep.subr.mxu0 0.0
    %425 = vmatpush1.msra.mxu0 0.0
    %426 = vmatprep.subr.mxu0 0.0
    %427 = vmatpush1.msra.mxu0 0.0
    %428 = vmatprep.subr.mxu0 0.0
    %429 = vmatpush1.msra.mxu0 0.0
    %430 = vmatprep.subr.mxu0 0.0
    %431 = vmatpush1.msra.mxu0 0.0
    %432 = vmatprep.subr.mxu0 0.0
    %433 = vmatpush1.msra.mxu0 0.0
    %434 = vmatprep.subr.mxu0 0.0
    %435 = vmatpush1.msra.mxu0 0.0
    %436 = vmatprep.subr.mxu0 0.0
    %437 = vmatpush1.msra.mxu0 0.0
    %438 = vmatprep.subr.mxu0 0.0
    %439 = vmatpush1.msra.mxu0 0.0
    %440 = vmatprep.subr.mxu0 0.0
    %441 = vmatpush1.msra.mxu0 0.0
    %442 = vmatprep.subr.mxu0 0.0
    %443 = vmatpush1.msra.mxu0 0.0
    %444 = vmatprep.subr.mxu0 0.0
    %445 = vmatpush1.msra.mxu0 0.0
    %446 = vmatprep.subr.mxu0 0.0
    %447 = vmatpush1.msra.mxu0 0.0
    %448 = vmatprep.subr.mxu0 0.0
    %449 = vmatpush1.msra.mxu0 0.0
    %450 = vmatprep.subr.mxu0 0.0
    %451 = vmatpush1.msra.mxu0 0.0
    %452 = vmatprep.subr.mxu0 0.0
    %453 = vmatpush1.msra.mxu0 0.0
    %454 = vmatprep.subr.mxu0 0.0
    %455 = vmatpush1.msra.mxu0 0.0
    %456 = vmatprep.subr.mxu0 0.0
    %457 = vmatpush1.msra.mxu0 0.0
    %458 = vmatprep.subr.mxu0 0.0
    %459 = vmatpush1.msra.mxu0 0.0
    %460 = vmatprep.mubr.f32.mxu0 0.0
    %461 = vmatmul.mubr.f32.gmra.mrb[0].mxu0 %v394
    %v462 = vpop.f32.mrb[0].mxu0
    %v463 = vadd.f32 0.0, %v462
    %v464 = vpop.f32.mrb[0].mxu0
    %465 = vdwg.mxu0
    %v466 = vrcp.pop %v463
    %v468 = vsel %vm136, %v466, 0
    %470 = vmatprep.subr.mxu0 0.0
    %471 = vmatpush1.msra.mxu0 %v468
    %472 = vmatprep.subr.mxu0 0.0
    %473 = vmatpush1.msra.mxu0 0.0
    %474 = vmatprep.subr.mxu0 0.0
    %475 = vmatpush1.msra.mxu0 0.0
    %476 = vmatprep.subr.mxu0 0.0
    %477 = vmatpush1.msra.mxu0 0.0
    %478 = vmatprep.subr.mxu0 0.0
    %479 = vmatpush1.msra.mxu0 0.0
    %480 = vmatprep.subr.mxu0 0.0
    %481 = vmatpush1.msra.mxu0 0.0
    %482 = vmatprep.subr.mxu0 0.0
    %483 = vmatpush1.msra.mxu0 0.0
    %484 = vmatprep.subr.mxu0 0.0
    %485 = vmatpush1.msra.mxu0 0.0
    %486 = vmatprep.subr.mxu0 0.0
    %487 = vmatpush1.msra.mxu0 0.0
    %488 = vmatprep.subr.mxu0 0.0
    %489 = vmatpush1.msra.mxu0 0.0
    %490 = vmatprep.subr.mxu0 0.0
    %491 = vmatpush1.msra.mxu0 0.0
    %492 = vmatprep.subr.mxu0 0.0
    %493 = vmatpush1.msra.mxu0 0.0
    %494 = vmatprep.subr.mxu0 0.0
    %495 = vmatpush1.msra.mxu0 0.0
    %496 = vmatprep.subr.mxu0 0.0
    %497 = vmatpush1.msra.mxu0 0.0
    %498 = vmatprep.subr.mxu0 0.0
    %499 = vmatpush1.msra.mxu0 0.0
    %500 = vmatprep.subr.mxu0 0.0
    %501 = vmatpush1.msra.mxu0 0.0
    %502 = vmatprep.subr.mxu0 0.0
    %503 = vmatpush1.msra.mxu0 0.0
    %504 = vmatprep.subr.mxu0 0.0
    %505 = vmatpush1.msra.mxu0 0.0
    %506 = vmatprep.subr.mxu0 0.0
    %507 = vmatpush1.msra.mxu0 0.0
    %508 = vmatprep.subr.mxu0 0.0
    %509 = vmatpush1.msra.mxu0 0.0
    %510 = vmatprep.subr.mxu0 0.0
    %511 = vmatpush1.msra.mxu0 0.0
    %512 = vmatprep.subr.mxu0 0.0
    %513 = vmatpush1.msra.mxu0 0.0
    %514 = vmatprep.subr.mxu0 0.0
    %515 = vmatpush1.msra.mxu0 0.0
    %516 = vmatprep.subr.mxu0 0.0
    %517 = vmatpush1.msra.mxu0 0.0
    %518 = vmatprep.subr.mxu0 0.0
    %519 = vmatpush1.msra.mxu0 0.0
    %520 = vmatprep.subr.mxu0 0.0
    %521 = vmatpush1.msra.mxu0 0.0
    %522 = vmatprep.subr.mxu0 0.0
    %523 = vmatpush1.msra.mxu0 0.0
    %524 = vmatprep.subr.mxu0 0.0
    %525 = vmatpush1.msra.mxu0 0.0
    %526 = vmatprep.subr.mxu0 0.0
    %527 = vmatpush1.msra.mxu0 0.0
    %528 = vmatprep.subr.mxu0 0.0
    %529 = vmatpush1.msra.mxu0 0.0
    %530 = vmatprep.subr.mxu0 0.0
    %531 = vmatpush1.msra.mxu0 0.0
    %532 = vmatprep.subr.mxu0 0.0
    %533 = vmatpush1.msra.mxu0 0.0
    %534 = vmatprep.mubr.f32.mxu0 0.0
    %535 = vmatmul.mubr.f32.gmra.mrb[0].mxu0 %v131
    %v536 = vpop.f32.mrb[0].mxu0
    %v537 = vadd.f32 0.0, %v536
    %v538 = vpop.f32.mrb[0].mxu0
    %539 = vmatprep.mubr.f32.mxu0 0.0
    %540 = vmatmul.mubr.f32.gmra.mrb[0].mxu0 %v134
    %v541 = vpop.f32.mrb[0].mxu0
    %v542 = vadd.f32 0.0, %v541
    %v543 = vpop.f32.mrb[0].mxu0
    %544 = vdwg.mxu0
    %v545 = vmul.f32 %v389, %v537
    %v546 = vmul.f32 %v391, %v542
    %v547 = vunpack.c.l.bf16 %v51
    %v548 = vunpack.c.l.bf16 %v52
    %550 = vset.pattern.permute.xlu0 0
    %551 = vperm.xlu0 %550, %v545
    %v552 = vpop.permute.xlu0 %551
    %555 = vset.pattern.permute.xlu0 0
    %556 = vperm.xlu0 %555, %v546
    %v557 = vpop.permute.xlu0 %556
    %v559 = vmul.f32 %v547, %v552
    %v560 = vmul.f32 %v548, %v557
    %561 = vmatprep.subr.mxu0 0.0
    %562 = vmatpush1.msra.mxu0 %v559
    %563 = vmatprep.subr.mxu0 0.0
    %564 = vmatpush1.msra.mxu0 %v560
    %565 = vmatprep.subr.mxu0 0.0
    %566 = vmatpush1.msra.mxu0 0.0
    %567 = vmatprep.subr.mxu0 0.0
    %568 = vmatpush1.msra.mxu0 0.0
    %569 = vmatprep.subr.mxu0 0.0
    %570 = vmatpush1.msra.mxu0 0.0
    %571 = vmatprep.subr.mxu0 0.0
    %572 = vmatpush1.msra.mxu0 0.0
    %573 = vmatprep.subr.mxu0 0.0
    %574 = vmatpush1.msra.mxu0 0.0
    %575 = vmatprep.subr.mxu0 0.0
    %576 = vmatpush1.msra.mxu0 0.0
    %577 = vmatprep.subr.mxu0 0.0
    %578 = vmatpush1.msra.mxu0 0.0
    %579 = vmatprep.subr.mxu0 0.0
    %580 = vmatpush1.msra.mxu0 0.0
    %581 = vmatprep.subr.mxu0 0.0
    %582 = vmatpush1.msra.mxu0 0.0
    %583 = vmatprep.subr.mxu0 0.0
    %584 = vmatpush1.msra.mxu0 0.0
    %585 = vmatprep.subr.mxu0 0.0
    %586 = vmatpush1.msra.mxu0 0.0
    %587 = vmatprep.subr.mxu0 0.0
    %588 = vmatpush1.msra.mxu0 0.0
    %589 = vmatprep.subr.mxu0 0.0
    %590 = vmatpush1.msra.mxu0 0.0
    %591 = vmatprep.subr.mxu0 0.0
    %592 = vmatpush1.msra.mxu0 0.0
    %593 = vmatprep.subr.mxu0 0.0
    %594 = vmatpush1.msra.mxu0 0.0
    %595 = vmatprep.subr.mxu0 0.0
    %596 = vmatpush1.msra.mxu0 0.0
    %597 = vmatprep.subr.mxu0 0.0
    %598 = vmatpush1.msra.mxu0 0.0
    %599 = vmatprep.subr.mxu0 0.0
    %600 = vmatpush1.msra.mxu0 0.0
    %601 = vmatprep.subr.mxu0 0.0
    %602 = vmatpush1.msra.mxu0 0.0
    %603 = vmatprep.subr.mxu0 0.0
    %604 = vmatpush1.msra.mxu0 0.0
    %605 = vmatprep.subr.mxu0 0.0
    %606 = vmatpush1.msra.mxu0 0.0
    %607 = vmatprep.subr.mxu0 0.0
    %608 = vmatpush1.msra.mxu0 0.0
    %609 = vmatprep.subr.mxu0 0.0
    %610 = vmatpush1.msra.mxu0 0.0
    %611 = vmatprep.subr.mxu0 0.0
    %612 = vmatpush1.msra.mxu0 0.0
    %613 = vmatprep.subr.mxu0 0.0
    %614 = vmatpush1.msra.mxu0 0.0
    %615 = vmatprep.subr.mxu0 0.0
    %616 = vmatpush1.msra.mxu0 0.0
    %617 = vmatprep.subr.mxu0 0.0
    %618 = vmatpush1.msra.mxu0 0.0
    %619 = vmatprep.subr.mxu0 0.0
    %620 = vmatpush1.msra.mxu0 0.0
    %621 = vmatprep.subr.mxu0 0.0
    %622 = vmatpush1.msra.mxu0 0.0
    %623 = vmatprep.subr.mxu0 0.0
    %624 = vmatpush1.msra.mxu0 0.0
    %625 = vmatprep.mubr.f32.mxu0 0.0
    %626 = vmatmul.mubr.f32.gmra.mrb[0].mxu0 %v394
    %v627 = vpop.f32.mrb[0].mxu0
    %v628 = vadd.f32 0.0, %v627
    %v629 = vpop.f32.mrb[0].mxu0
    %630 = vdwg.mxu0
    %vm631 = vcmask 517120
    %632 = vst.msk [vmem:[#allocation2] sm:$0x3] %vm631, %v628
    // Predicated region
    $region26: #{attention_forward.1} parent=1 // pred_check
      _
    $region27: #{attention_forward.1} parent=1 // pred_check_branch
      %634 = sbr.rel (0) target = $region29
    $region28: #{attention_forward.1} parent=1 // pred_region
      %s636 = ssub.s32 32, 32
      %637 = vsyncadd [#allocation3], %s636
      %s639 = sshll.u32 [#allocation2], 4
      %s640 = int_to_ptr.vmem [resolvable:$true] %s639
      %642 = dma.vmem_to_hbm [thread:$0]  %s640, 32, %s6, [#allocation3]
    $region29: #{attention_forward.1} parent=1 // pred_fallthru
      _
    // Predicated region
    $region30: #{attention_forward.1} parent=1 // pred_check
      _
    $region31: #{attention_forward.1} parent=1 // pred_check_branch
      %644 = sbr.rel (0) target = $region33
    $region32: #{attention_forward.1} parent=1 // pred_region
      %645 = dma.done [#allocation3], 32
    $region33: #{attention_forward.1} parent=1 // pred_fallthru
      _
    %646 = vsyncpa [#allocation3], 1

</llo_original>
